<compile_context>
chip_gen: v5e
topology: v5e:2x2
jax: 0.10.0
libtpu: 0.0.40
codegen_flags: <defaults>
</compile_context>

<pallas_src>
import jax
import jax.numpy as jnp
from jax.experimental import pallas as pl
from jax.experimental.pallas import tpu as pltpu


def _round_up(n, m):
    return ((n + m - 1) // m) * m


def dual_input_kernel(x1_ref, x2_ref, w1_ref, w2_ref, va_ref, vb_ref, out_ref):
    """One batch tile: shared 2-layer encoder per input + folded VPU projection."""
    cd = w1_ref.dtype  # bf16 compute dtype for the MXU feeds

    def enc(x_ref):
        x = x_ref[...].astype(cd)                                      # f32 -> bf16 in-kernel
        h = jnp.dot(x, w1_ref[...], preferred_element_type=jnp.float32)  # [tm, H1p]
        h = jnp.maximum(h, 0.0).astype(cd)                              # ReLU
        h = jnp.dot(h, w2_ref[...], preferred_element_type=jnp.float32)  # [tm, H2p]
        return jnp.maximum(h, 0.0)                                      # ReLU, f32

    # Folded output projection: elementwise VPU multiply + XLU lane reduce.
    # out_layer(cat([enc3(x1), enc3(x2)])) == h2(x1)@(w3@w_out[:R]) + h2(x2)@(w3@w_out[R:])
    p = (jnp.sum(enc(x1_ref) * va_ref[...], axis=-1)
         + jnp.sum(enc(x2_ref) * vb_ref[...], axis=-1))                 # [tm] f32

    out_ref[...] = p[None, None, :]                                     # lane-dense (1, 1, tm)


def dual_input_net(x1, x2, w1, w2, w3, w_out, *, block_b=4096,
                   compute_dtype=jnp.bfloat16):
    """Pallas forward pass. Weights are [in, out] (transpose of nn.Linear.weight)."""
    assert x1.shape == x2.shape
    B, F = x1.shape
    H1 = w1.shape[1]
    H2 = w2.shape[1]
    R = w3.shape[1]
    assert w_out.shape[0] == 2 * R and w_out.shape[1] == 1

    cd = compute_dtype

    # --- Zero-pad hidden dims to lane-dense 128 (exact: ReLU(0)=0). ---
    H1p = _round_up(H1, 128)   # 100 -> 128
    H2p = _round_up(H2, 128)   # 50  -> 128
    w1p = jnp.zeros((F, H1p), cd).at[:, :H1].set(w1.astype(cd))
    w2p = jnp.zeros((H1p, H2p), cd).at[:H1, :H2].set(w2.astype(cd))

    # --- Fold w3 into the output projection (in f32): va/vb are [1, H2p]. ---
    w3f = w3.astype(jnp.float32)
    wof = w_out.astype(jnp.float32)
    va = jnp.zeros((1, H2p), jnp.float32).at[0, :H2].set((w3f @ wof[:R])[:, 0])
    vb = jnp.zeros((1, H2p), jnp.float32).at[0, :H2].set((w3f @ wof[R:])[:, 0])

    # --- Batch tiling: tm multiple of 16 (bf16 sublane packing), keep the grid
    #     length >= 2 when possible so v7x's two TensorCores both get work. ---
    tm = min(block_b, _round_up((B + 1) // 2, 16))
    tm = max(16, _round_up(tm, 16))
    Bp = _round_up(B, tm)
    if Bp != B:
        pad = Bp - B
        x1 = jnp.pad(x1, ((0, pad), (0, 0)))
        x2 = jnp.pad(x2, ((0, pad), (0, 0)))
    # NOTE: no wrapper-side dtype cast; f32 blocks are cast to bf16 in-kernel.

    num_tiles = Bp // tm
    grid = (num_tiles,)

    x_spec = pl.BlockSpec((tm, F), lambda i: (i, 0))
    # Constant index_map -> weights stay VMEM-resident across the batch grid.
    w1_spec = pl.BlockSpec((F, H1p), lambda i: (0, 0))
    w2_spec = pl.BlockSpec((H1p, H2p), lambda i: (0, 0))
    v_spec = pl.BlockSpec((1, H2p), lambda i: (0, 0))
    # Lane-dense output: (1, 1, tm) blocks of a (num_tiles, 1, tm) array.
    out_spec = pl.BlockSpec((1, 1, tm), lambda i: (i, 0, 0))

    out = pl.pallas_call(
        dual_input_kernel,
        out_shape=jax.ShapeDtypeStruct((num_tiles, 1, tm), jnp.float32),
        grid=grid,
        in_specs=[x_spec, x_spec, w1_spec, w2_spec, v_spec, v_spec],
        out_specs=out_spec,
        compiler_params=pltpu.CompilerParams(
            dimension_semantics=("parallel",),
            vmem_limit_bytes=32 * 1024 * 1024),
    )(x1, x2, w1p, w2p, va, vb)

    return out.reshape(-1)[:B].reshape(B, 1)


def init_params(key, n_features, hidden=(100, 50), rep_dim=64):
    """Deterministic synthetic weights, stored as [in, out]."""
    k1, k2, k3, k4 = jax.random.split(key, 4)

    def lin(k, fan_in, fan_out):
        bound = 1.0 / jnp.sqrt(jnp.float32(fan_in))
        return jax.random.uniform(k, (fan_in, fan_out), jnp.float32, -bound, bound)

    w1 = lin(k1, n_features, hidden[0])       # F -> 100
    w2 = lin(k2, hidden[0], hidden[1])        # 100 -> 50
    w3 = lin(k3, hidden[1], rep_dim)          # 50 -> 64
    w_out = lin(k4, 2 * rep_dim, 1)           # 128 -> 1
    return w1, w2, w3, w_out


def reference_forward(x1, x2, w1, w2, w3, w_out, compute_dtype=jnp.bfloat16):
    """Plain-JAX reference matching the kernel math (bf16 MXU feeds, f32
    accumulation, w3 folded into the output projection in f32)."""
    cd = compute_dtype
    R = w3.shape[1]

    def enc2(x):
        h = jnp.dot(x.astype(cd), w1.astype(cd), preferred_element_type=jnp.float32)
        h = jnp.maximum(h, 0.0).astype(cd)
        h = jnp.dot(h, w2.astype(cd), preferred_element_type=jnp.float32)
        return jnp.maximum(h, 0.0)                                   # f32

    wof = w_out.astype(jnp.float32)
    va = w3.astype(jnp.float32) @ wof[:R]                            # [H2, 1]
    vb = w3.astype(jnp.float32) @ wof[R:]                            # [H2, 1]
    return enc2(x1) @ va + enc2(x2) @ vb


if __name__ == "__main__":
    B, F = 8, 16                               # small shapes: batch=8, n_features=16
    key = jax.random.PRNGKey(0)
    kx1, kx2, kp = jax.random.split(key, 3)

    x1 = jax.random.normal(kx1, (B, F), jnp.float32)
    x2 = jax.random.normal(kx2, (B, F), jnp.float32)
    w1, w2, w3, w_out = init_params(kp, F)

    pred = dual_input_net(x1, x2, w1, w2, w3, w_out)
    pred = jax.block_until_ready(pred)

    ref = reference_forward(x1, x2, w1, w2, w3, w_out)
    assert pred.shape == (B, 1)
    assert jnp.allclose(pred, ref, atol=1e-3, rtol=1e-3), "mismatch vs JAX reference"

    print("KERNEL_OK")
</pallas_src>

<mosaic_0001>
module attributes {stable_mosaic.version = 11 : i64} {
  func.func @dual_input_kernel(%arg0: i32, %arg1: memref<16x16xf32, #tpu.memory_space<vmem>>, %arg2: memref<16x16xf32, #tpu.memory_space<vmem>>, %arg3: memref<16x128xbf16, #tpu.memory_space<vmem>>, %arg4: memref<128x128xbf16, #tpu.memory_space<vmem>>, %arg5: memref<1x128xf32, #tpu.memory_space<vmem>>, %arg6: memref<1x128xf32, #tpu.memory_space<vmem>>, %arg7: memref<1x1x16xf32, #tpu.memory_space<vmem>>) attributes {dimension_semantics = [#tpu.dimension_semantics<parallel>], iteration_bounds = array<i64: 1>, scalar_prefetch = 0 : i64, scratch_operands = 0 : i64, tpu.core_type = #tpu.core_type<tc>, window_params = [{transform_indices = @transform_0, window_bounds = array<i64: 16, 16>}, {transform_indices = @transform_1, window_bounds = array<i64: 16, 16>}, {pipeline_mode = #tpu.pipeline_mode<synchronous>, transform_indices = @transform_2, window_bounds = array<i64: 16, 128>}, {pipeline_mode = #tpu.pipeline_mode<synchronous>, transform_indices = @transform_3, window_bounds = array<i64: 128, 128>}, {pipeline_mode = #tpu.pipeline_mode<synchronous>, transform_indices = @transform_4, window_bounds = array<i64: 1, 128>}, {pipeline_mode = #tpu.pipeline_mode<synchronous>, transform_indices = @transform_5, window_bounds = array<i64: 1, 128>}, {transform_indices = @transform_6, window_bounds = array<i64: 1, 1, 16>}]} {
    %c0 = arith.constant 0 : index
    %c0_0 = arith.constant 0 : index
    %0 = vector.load %arg1[%c0, %c0_0] : memref<16x16xf32, #tpu.memory_space<vmem>>, vector<16x16xf32>
    %1 = arith.truncf %0 : vector<16x16xf32> to vector<16x16xbf16>
    %c0_1 = arith.constant 0 : index
    %c0_2 = arith.constant 0 : index
    %2 = vector.load %arg3[%c0_1, %c0_2] : memref<16x128xbf16, #tpu.memory_space<vmem>>, vector<16x128xbf16>
    %cst = arith.constant dense<0.000000e+00> : vector<16x128xf32>
    %3 = tpu.matmul %1, %2, %cst {dimension_numbers = #tpu.dot_dimension_numbers<[1], [0], [0], [1], [0, 0, 1, 1], [], []>} : vector<16x16xbf16>, vector<16x128xbf16>, vector<16x128xf32> -> vector<16x128xf32>
    %cst_3 = arith.constant 0.000000e+00 : f32
    %4 = vector.broadcast %cst_3 : f32 to vector<16x128xf32>
    %5 = arith.maximumf %3, %4 : vector<16x128xf32>
    %6 = arith.truncf %5 : vector<16x128xf32> to vector<16x128xbf16>
    %c0_4 = arith.constant 0 : index
    %c0_5 = arith.constant 0 : index
    %7 = vector.load %arg4[%c0_4, %c0_5] : memref<128x128xbf16, #tpu.memory_space<vmem>>, vector<128x128xbf16>
    %cst_6 = arith.constant dense<0.000000e+00> : vector<16x128xf32>
    %8 = tpu.matmul %6, %7, %cst_6 {dimension_numbers = #tpu.dot_dimension_numbers<[1], [0], [0], [1], [0, 0, 1, 1], [], []>} : vector<16x128xbf16>, vector<128x128xbf16>, vector<16x128xf32> -> vector<16x128xf32>
    %cst_7 = arith.constant 0.000000e+00 : f32
    %9 = vector.broadcast %cst_7 : f32 to vector<16x128xf32>
    %10 = arith.maximumf %8, %9 : vector<16x128xf32>
    %c0_8 = arith.constant 0 : index
    %c0_9 = arith.constant 0 : index
    %11 = vector.load %arg5[%c0_8, %c0_9] : memref<1x128xf32, #tpu.memory_space<vmem>>, vector<1x128xf32>
    %12 = vector.broadcast %11 : vector<1x128xf32> to vector<16x128xf32>
    %13 = arith.mulf %10, %12 : vector<16x128xf32>
    %cst_10 = arith.constant dense<0.000000e+00> : vector<16xf32>
    %14 = vector.multi_reduction <add>, %13, %cst_10 [1] : vector<16x128xf32> to vector<16xf32>
    %c0_11 = arith.constant 0 : index
    %c0_12 = arith.constant 0 : index
    %15 = vector.load %arg2[%c0_11, %c0_12] : memref<16x16xf32, #tpu.memory_space<vmem>>, vector<16x16xf32>
    %16 = arith.truncf %15 : vector<16x16xf32> to vector<16x16xbf16>
    %c0_13 = arith.constant 0 : index
    %c0_14 = arith.constant 0 : index
    %17 = vector.load %arg3[%c0_13, %c0_14] : memref<16x128xbf16, #tpu.memory_space<vmem>>, vector<16x128xbf16>
    %cst_15 = arith.constant dense<0.000000e+00> : vector<16x128xf32>
    %18 = tpu.matmul %16, %17, %cst_15 {dimension_numbers = #tpu.dot_dimension_numbers<[1], [0], [0], [1], [0, 0, 1, 1], [], []>} : vector<16x16xbf16>, vector<16x128xbf16>, vector<16x128xf32> -> vector<16x128xf32>
    %cst_16 = arith.constant 0.000000e+00 : f32
    %19 = vector.broadcast %cst_16 : f32 to vector<16x128xf32>
    %20 = arith.maximumf %18, %19 : vector<16x128xf32>
    %21 = arith.truncf %20 : vector<16x128xf32> to vector<16x128xbf16>
    %c0_17 = arith.constant 0 : index
    %c0_18 = arith.constant 0 : index
    %22 = vector.load %arg4[%c0_17, %c0_18] : memref<128x128xbf16, #tpu.memory_space<vmem>>, vector<128x128xbf16>
    %cst_19 = arith.constant dense<0.000000e+00> : vector<16x128xf32>
    %23 = tpu.matmul %21, %22, %cst_19 {dimension_numbers = #tpu.dot_dimension_numbers<[1], [0], [0], [1], [0, 0, 1, 1], [], []>} : vector<16x128xbf16>, vector<128x128xbf16>, vector<16x128xf32> -> vector<16x128xf32>
    %cst_20 = arith.constant 0.000000e+00 : f32
    %24 = vector.broadcast %cst_20 : f32 to vector<16x128xf32>
    %25 = arith.maximumf %23, %24 : vector<16x128xf32>
    %c0_21 = arith.constant 0 : index
    %c0_22 = arith.constant 0 : index
    %26 = vector.load %arg6[%c0_21, %c0_22] : memref<1x128xf32, #tpu.memory_space<vmem>>, vector<1x128xf32>
    %27 = vector.broadcast %26 : vector<1x128xf32> to vector<16x128xf32>
    %28 = arith.mulf %25, %27 : vector<16x128xf32>
    %cst_23 = arith.constant dense<0.000000e+00> : vector<16xf32>
    %29 = vector.multi_reduction <add>, %28, %cst_23 [1] : vector<16x128xf32> to vector<16xf32>
    %30 = arith.addf %14, %29 : vector<16xf32>
    %31 = vector.shape_cast %30 : vector<16xf32> to vector<1x1x16xf32>
    %c0_24 = arith.constant 0 : index
    %c0_25 = arith.constant 0 : index
    %c0_26 = arith.constant 0 : index
    %32 = vector.load %arg7[%c0_24, %c0_25, %c0_26] : memref<1x1x16xf32, #tpu.memory_space<vmem>>, vector<1x1x16xf32>
    tpu.vector_store %arg7[%c0_24, %c0_25, %c0_26], %31 {strides = array<i32>} : memref<1x1x16xf32, #tpu.memory_space<vmem>>, vector<1x1x16xf32>,
    return
  }
  func.func @transform_0(%arg0: i32) -> (i32, i32) {
    %c0_i32 = arith.constant 0 : i32
    %c0_i32_0 = arith.constant 0 : i32
    return %arg0, %c0_i32 : i32, i32
  }
  func.func @transform_1(%arg0: i32) -> (i32, i32) {
    %c0_i32 = arith.constant 0 : i32
    %c0_i32_0 = arith.constant 0 : i32
    return %arg0, %c0_i32 : i32, i32
  }
  func.func @transform_2(%arg0: i32) -> (i32, i32) {
    %c0_i32 = arith.constant 0 : i32
    %c0_i32_0 = arith.constant 0 : i32
    %c0_i32_1 = arith.constant 0 : i32
    return %c0_i32, %c0_i32_0 : i32, i32
  }
  func.func @transform_3(%arg0: i32) -> (i32, i32) {
    %c0_i32 = arith.constant 0 : i32
    %c0_i32_0 = arith.constant 0 : i32
    %c0_i32_1 = arith.constant 0 : i32
    return %c0_i32, %c0_i32_0 : i32, i32
  }
  func.func @transform_4(%arg0: i32) -> (i32, i32) {
    %c0_i32 = arith.constant 0 : i32
    %c0_i32_0 = arith.constant 0 : i32
    %c0_i32_1 = arith.constant 0 : i32
    return %c0_i32, %c0_i32_0 : i32, i32
  }
  func.func @transform_5(%arg0: i32) -> (i32, i32) {
    %c0_i32 = arith.constant 0 : i32
    %c0_i32_0 = arith.constant 0 : i32
    %c0_i32_1 = arith.constant 0 : i32
    return %c0_i32, %c0_i32_0 : i32, i32
  }
  func.func @transform_6(%arg0: i32) -> (i32, i32, i32) {
    %c0_i32 = arith.constant 0 : i32
    %c0_i32_0 = arith.constant 0 : i32
    %c0_i32_1 = arith.constant 0 : i32
    return %arg0, %c0_i32, %c0_i32_0 : i32, i32, i32
  }
}

</mosaic_0001>

<llo_original>
// kernel: tpu_custom_call.1
$region0: #{tpu_custom_call.1}
  #allocation0 [shape = 'u32[]', space=smem, size = 0x4, offset = 0x4, fixed_abs, tag = 'smem constant byte address 0x4 - core index']
  #allocation1 [shape = 'u32[72,128]{1,0:T(1,128)}', space=vmem, size = 0x9000, scoped, tag = 'internal scratch']
  %s0 = inlined_call_operand.hbm [shape: f32[16,16], index: 0, kind: input, shape index: {}]
  %s1 = inlined_call_operand.hbm [shape: f32[16,16], index: 1, kind: input, shape index: {}]
  %s2 = inlined_call_operand.hbm [shape: bf16[16,128], index: 2, kind: input, shape index: {}]
  %s3 = inlined_call_operand.hbm [shape: bf16[128,128], index: 3, kind: input, shape index: {}]
  %s4 = inlined_call_operand.vmem [shape: f32[1,128], index: 4, kind: input, shape index: {}]
  %s5 = inlined_call_operand.vmem [shape: f32[1,128], index: 5, kind: input, shape index: {}]
  %s6 = inlined_call_operand.hbm [shape: f32[1,1,16], index: 6, kind: output, shape index: {}]
  %s7 = sld [smem:[#allocation0]]
  $region50: #{tpu_custom_call.1} parent=0
    _
  %s9 = ssub.s32 1, %s7
  %s10 = scalar_select 0, %s9, %s7
  $region1: #{tpu_custom_call.1} parent=0
    #allocation2 [shape = 'u8[8192]{0}', space=vmem, size = 0x2000, scoped, tag = 'input window, operand 0, single buffered']
    #allocation3 [shape = 's32[1]{0}', space=sflag, size = 0x4, scoped, tag = 'scoped memory for tpu_custom_call.1']
    #allocation4 [shape = 's32[1]{0}', space=sflag, size = 0x4, scoped, tag = 'scoped memory for tpu_custom_call.1']
    #allocation5 [shape = 'u8[8192]{0}', space=vmem, size = 0x2000, scoped, tag = 'input window, operand 1, single buffered']
    #allocation6 [shape = 's32[1]{0}', space=sflag, size = 0x4, scoped, tag = 'scoped memory for tpu_custom_call.1']
    #allocation7 [shape = 'u8[4096]{0}', space=vmem, size = 0x1000, scoped, tag = 'input window, operand 2, single buffered']
    #allocation8 [shape = 'u8[32768]{0}', space=vmem, size = 0x8000, scoped, tag = 'input window, operand 3, single buffered']
    #allocation9 [shape = 's32[1]{0}', space=sflag, size = 0x4, scoped, tag = 'scoped memory for tpu_custom_call.1']
    #allocation10 [shape = 'u8[512]{0}', space=vmem, size = 0x400, scoped, tag = 'output window, operand 0, single buffered']
    %11 = vsyncpa [#allocation3], 0
    %12 = vsyncpa [#allocation6], 0
    %13 = vsyncpa [#allocation9], 0
    %14 = vsyncpa [#allocation4], 0
    // Predicated region
    $region2: #{tpu_custom_call.1} parent=1 // pred_check
      _
    $region3: #{tpu_custom_call.1} parent=1 // pred_check_branch
      %16 = sbr.rel (0) target = $region5
    $region4: #{tpu_custom_call.1} parent=1 // pred_region
      %18 = vsyncadd [#allocation3], 0
      %s19 = sshll.u32 %s0, 4
      %s20 = int_to_ptr.hbm [resolvable:$true] %s19
      %s21 = sshll.u32 [#allocation2], 4
      %s22 = int_to_ptr.vmem [resolvable:$true] %s21
      %27 = dma.hbm_to_vmem [thread:$0]  %s20, 256, %s22, [#allocation3], 128, 128, 8
    $region5: #{tpu_custom_call.1} parent=1 // pred_fallthru
      _
    // Predicated region
    $region6: #{tpu_custom_call.1} parent=1 // pred_check
      _
    $region7: #{tpu_custom_call.1} parent=1 // pred_check_branch
      %29 = sbr.rel (0) target = $region9
    $region8: #{tpu_custom_call.1} parent=1 // pred_region
      %31 = vsyncadd [#allocation6], 0
      %s32 = sshll.u32 %s1, 4
      %s33 = int_to_ptr.hbm [resolvable:$true] %s32
      %s34 = sshll.u32 [#allocation5], 4
      %s35 = int_to_ptr.vmem [resolvable:$true] %s34
      %40 = dma.hbm_to_vmem [thread:$0]  %s33, 256, %s35, [#allocation6], 128, 128, 8
    $region9: #{tpu_custom_call.1} parent=1 // pred_fallthru
      _
    // Predicated region
    $region10: #{tpu_custom_call.1} parent=1 // pred_check
      _
    $region11: #{tpu_custom_call.1} parent=1 // pred_check_branch
      %42 = sbr.rel (0) target = $region13
    $region12: #{tpu_custom_call.1} parent=1 // pred_region
      %44 = vsyncadd [#allocation6], 0
      %s45 = sshll.u32 %s2, 4
      %s46 = int_to_ptr.hbm [resolvable:$true] %s45
      %s47 = sshll.u32 [#allocation7], 4
      %s48 = int_to_ptr.vmem [resolvable:$true] %s47
      %53 = dma.hbm_to_vmem [thread:$0]  %s46, 128, %s48, [#allocation6], 64, 64, 4
    $region13: #{tpu_custom_call.1} parent=1 // pred_fallthru
      _
    // Predicated region
    $region14: #{tpu_custom_call.1} parent=1 // pred_check
      _
    $region15: #{tpu_custom_call.1} parent=1 // pred_check_branch
      %55 = sbr.rel (0) target = $region17
    $region16: #{tpu_custom_call.1} parent=1 // pred_region
      %57 = vsyncadd [#allocation9], 0
      %s58 = sshll.u32 %s3, 4
      %s59 = int_to_ptr.hbm [resolvable:$true] %s58
      %s60 = sshll.u32 [#allocation8], 4
      %s61 = int_to_ptr.vmem [resolvable:$true] %s60
      %66 = dma.hbm_to_vmem [thread:$0]  %s59, 1024, %s61, [#allocation9], 64, 64, 4
    $region17: #{tpu_custom_call.1} parent=1 // pred_fallthru
      _
    // Predicated region
    $region18: #{tpu_custom_call.1} parent=1 // pred_check
      _
    $region19: #{tpu_custom_call.1} parent=1 // pred_check_branch
      %68 = sbr.rel (0) target = $region21
    $region20: #{tpu_custom_call.1} parent=1 // pred_region
      _
    $region21: #{tpu_custom_call.1} parent=1 // pred_fallthru
      _
    // Predicated region
    $region22: #{tpu_custom_call.1} parent=1 // pred_check
      _
    $region23: #{tpu_custom_call.1} parent=1 // pred_check_branch
      %70 = sbr.rel (0) target = $region25
    $region24: #{tpu_custom_call.1} parent=1 // pred_region
      _
    $region25: #{tpu_custom_call.1} parent=1 // pred_fallthru
      _
    // Predicated region
    $region26: #{tpu_custom_call.1} parent=1 // pred_check
      _
    $region27: #{tpu_custom_call.1} parent=1 // pred_check_branch
      %72 = sbr.rel (0) target = $region29
    $region28: #{tpu_custom_call.1} parent=1 // pred_region
      %74 = dma.done [#allocation3], 256
    $region29: #{tpu_custom_call.1} parent=1 // pred_fallthru
      _
    // Predicated region
    $region30: #{tpu_custom_call.1} parent=1 // pred_check
      _
    $region31: #{tpu_custom_call.1} parent=1 // pred_check_branch
      %76 = sbr.rel (0) target = $region33
    $region32: #{tpu_custom_call.1} parent=1 // pred_region
      %78 = dma.done [#allocation6], 256
    $region33: #{tpu_custom_call.1} parent=1 // pred_fallthru
      _
    // Predicated region
    $region34: #{tpu_custom_call.1} parent=1 // pred_check
      _
    $region35: #{tpu_custom_call.1} parent=1 // pred_check_branch
      %80 = sbr.rel (0) target = $region37
    $region36: #{tpu_custom_call.1} parent=1 // pred_region
      %82 = dma.done [#allocation6], 128
    $region37: #{tpu_custom_call.1} parent=1 // pred_fallthru
      _
    // Predicated region
    $region38: #{tpu_custom_call.1} parent=1 // pred_check
      _
    $region39: #{tpu_custom_call.1} parent=1 // pred_check_branch
      %84 = sbr.rel (0) target = $region41
    $region40: #{tpu_custom_call.1} parent=1 // pred_region
      %86 = dma.done [#allocation9], 1024
    $region41: #{tpu_custom_call.1} parent=1 // pred_fallthru
      _
    %v88 = vld [vmem:[#allocation2] sm:$0xff]
    %v89 = vld [vmem:[#allocation2 + $0x8] sm:$0xff]
    %v90 = vpack.c.bf16 %v89, %v88
    %v91 = vld [vmem:[#allocation7] sm:$0xf]
    %v92 = vld [vmem:[#allocation7 + $0x4] sm:$0xf]
    %v95 = vunpack.c.l.b16 %v91
    %v96 = vunpack.c.l.b16 %v92
    %v97 = vpack.c.b16 %v96, %v95
    %vm99 = vcmask 130048
    %v101 = vsel %vm99, %v90, 0
    %103 = vmatpush.bf16.msra.mxu0 0
    %104 = vmatpush.bf16.msra.mxu0 0
    %105 = vmatpush.bf16.msra.mxu0 0
    %106 = vmatpush.bf16.msra.mxu0 0
    %107 = vmatpush.bf16.msra.mxu0 0
    %108 = vmatpush.bf16.msra.mxu0 0
    %109 = vmatpush.bf16.msra.mxu0 0
    %110 = vmatpush.bf16.msra.mxu0 %v97
    %111 = vmatmul.bf16.gmra.mxu0 %v101
    %v112 = vpop.f32.mrf.mxu0
    %v113 = vadd.f32 0.0, %v112
    %v114 = vpop.f32.mrf.mxu0
    %v115 = vadd.f32 0.0, %v114
    %116 = vdwg.mxu0
    %v117 = vmax.f32 %v113, 0.0
    %v118 = vmax.f32 %v115, 0.0
    %v119 = vpack.c.bf16 %v118, %v117
    %v120 = vld [vmem:[#allocation8] sm:$0xf]
    %v121 = vld [vmem:[#allocation8 + $0x4] sm:$0xf]
    %v122 = vld [vmem:[#allocation8 + $0x8] sm:$0xf]
    %v123 = vld [vmem:[#allocation8 + $0xc] sm:$0xf]
    %v124 = vld [vmem:[#allocation8 + $0x10] sm:$0xf]
    %v125 = vld [vmem:[#allocation8 + $0x14] sm:$0xf]
    %v126 = vld [vmem:[#allocation8 + $0x18] sm:$0xf]
    %v127 = vld [vmem:[#allocation8 + $0x1c] sm:$0xf]
    %v128 = vld [vmem:[#allocation8 + $0x20] sm:$0xf]
    %v129 = vld [vmem:[#allocation8 + $0x24] sm:$0xf]
    %v130 = vld [vmem:[#allocation8 + $0x28] sm:$0xf]
    %v131 = vld [vmem:[#allocation8 + $0x2c] sm:$0xf]
    %v132 = vld [vmem:[#allocation8 + $0x30] sm:$0xf]
    %v133 = vld [vmem:[#allocation8 + $0x34] sm:$0xf]
    %v134 = vld [vmem:[#allocation8 + $0x38] sm:$0xf]
    %v135 = vld [vmem:[#allocation8 + $0x3c] sm:$0xf]
    %v152 = vunpack.c.l.b16 %v120
    %v153 = vunpack.c.l.b16 %v121
    %v154 = vunpack.c.l.b16 %v122
    %v155 = vunpack.c.l.b16 %v123
    %v156 = vunpack.c.l.b16 %v124
    %v157 = vunpack.c.l.b16 %v125
    %v158 = vunpack.c.l.b16 %v126
    %v159 = vunpack.c.l.b16 %v127
    %v160 = vunpack.c.l.b16 %v128
    %v161 = vunpack.c.l.b16 %v129
    %v162 = vunpack.c.l.b16 %v130
    %v163 = vunpack.c.l.b16 %v131
    %v164 = vunpack.c.l.b16 %v132
    %v165 = vunpack.c.l.b16 %v133
    %v166 = vunpack.c.l.b16 %v134
    %v167 = vunpack.c.l.b16 %v135
    %v168 = vpack.c.b16 %v153, %v152
    %v169 = vpack.c.b16 %v155, %v154
    %v170 = vpack.c.b16 %v157, %v156
    %v171 = vpack.c.b16 %v159, %v158
    %v172 = vpack.c.b16 %v161, %v160
    %v173 = vpack.c.b16 %v163, %v162
    %v174 = vpack.c.b16 %v165, %v164
    %v175 = vpack.c.b16 %v167, %v166
    %184 = vmatpush.bf16.msra.mxu0 %v175
    %185 = vmatpush.bf16.msra.mxu0 %v174
    %186 = vmatpush.bf16.msra.mxu0 %v173
    %187 = vmatpush.bf16.msra.mxu0 %v172
    %188 = vmatpush.bf16.msra.mxu0 %v171
    %189 = vmatpush.bf16.msra.mxu0 %v170
    %190 = vmatpush.bf16.msra.mxu0 %v169
    %191 = vmatpush.bf16.msra.mxu0 %v168
    %192 = vmatmul.bf16.gmra.mxu0 %v119
    %v193 = vpop.f32.mrf.mxu0
    %v194 = vadd.f32 0.0, %v193
    %v195 = vpop.f32.mrf.mxu0
    %v196 = vadd.f32 0.0, %v195
    %197 = vdwg.mxu0
    %v198 = vmax.f32 %v194, 0.0
    %v199 = vmax.f32 %v196, 0.0
    %v200 = vld [vmem:[%s4] sm:$0x1]
    %v202 = vperm.slane %v200, 0
    %v204 = vmul.f32 %v198, %v202
    %v205 = vmul.f32 %v199, %v202
    %206 = vadd.xlane.f32.xlu0 %v204
    %v207 = vpop.xlane.xlu0 %206
    %208 = vadd.xlane.f32.xlu0 %v205
    %v209 = vpop.xlane.xlu0 %208
    %v210 = vld [vmem:[#allocation5] sm:$0xff]
    %v211 = vld [vmem:[#allocation5 + $0x8] sm:$0xff]
    %v212 = vpack.c.bf16 %v211, %v210
    %v214 = vsel %vm99, %v212, 0
    %216 = vmatpush.bf16.msra.mxu0 0
    %217 = vmatpush.bf16.msra.mxu0 0
    %218 = vmatpush.bf16.msra.mxu0 0
    %219 = vmatpush.bf16.msra.mxu0 0
    %220 = vmatpush.bf16.msra.mxu0 0
    %221 = vmatpush.bf16.msra.mxu0 0
    %222 = vmatpush.bf16.msra.mxu0 0
    %223 = vmatpush.bf16.msra.mxu0 %v97
    %224 = vmatmul.bf16.gmra.mxu0 %v214
    %v225 = vpop.f32.mrf.mxu0
    %v226 = vadd.f32 0.0, %v225
    %v227 = vpop.f32.mrf.mxu0
    %v228 = vadd.f32 0.0, %v227
    %229 = vdwg.mxu0
    %v230 = vmax.f32 %v226, 0.0
    %v231 = vmax.f32 %v228, 0.0
    %v232 = vpack.c.bf16 %v231, %v230
    %233 = vmatpush.bf16.msra.mxu0 %v175
    %234 = vmatpush.bf16.msra.mxu0 %v174
    %235 = vmatpush.bf16.msra.mxu0 %v173
    %236 = vmatpush.bf16.msra.mxu0 %v172
    %237 = vmatpush.bf16.msra.mxu0 %v171
    %238 = vmatpush.bf16.msra.mxu0 %v170
    %239 = vmatpush.bf16.msra.mxu0 %v169
    %240 = vmatpush.bf16.msra.mxu0 %v168
    %241 = vmatmul.bf16.gmra.mxu0 %v232
    %v242 = vpop.f32.mrf.mxu0
    %v243 = vadd.f32 0.0, %v242
    %v244 = vpop.f32.mrf.mxu0
    %v245 = vadd.f32 0.0, %v244
    %246 = vdwg.mxu0
    %v247 = vmax.f32 %v243, 0.0
    %v248 = vmax.f32 %v245, 0.0
    %v249 = vld [vmem:[%s5] sm:$0x1]
    %v251 = vperm.slane %v249, 0
    %v253 = vmul.f32 %v247, %v251
    %v254 = vmul.f32 %v248, %v251
    %255 = vadd.xlane.f32.xlu0 %v253
    %v256 = vpop.xlane.xlu0 %255
    %257 = vadd.xlane.f32.xlu0 %v254
    %v258 = vpop.xlane.xlu0 %257
    %v259 = vadd.f32 %v207, %v256
    %v260 = vadd.f32 %v209, %v258
    %v263 = vlaneseq
    %v264 = vand.u32 %v263, 127
    %v265 = vperm.slane %v259, %v264
    %v266 = vadd.s32 %v264, 4294967288
    %v267 = vperm.slane %v260, %v266
    %vm268 = vcmask 130112
    %v269 = vsel %vm268, %v267, %v265
    %vm271 = vcmask 122880
    %272 = vst.msk [vmem:[#allocation10] sm:$0x1] %vm271, %v269
    // Predicated region
    $region42: #{tpu_custom_call.1} parent=1 // pred_check
      _
    $region43: #{tpu_custom_call.1} parent=1 // pred_check_branch
      %274 = sbr.rel (0) target = $region45
    $region44: #{tpu_custom_call.1} parent=1 // pred_region
      %276 = vsyncadd [#allocation4], 0
      %s278 = sshll.u32 [#allocation10], 4
      %s279 = int_to_ptr.vmem [resolvable:$true] %s278
      %s280 = sshll.u32 %s6, 4
      %s281 = int_to_ptr.hbm [resolvable:$true] %s280
      %283 = dma.vmem_to_hbm [thread:$0]  %s279, 16, %s281, [#allocation4]
    $region45: #{tpu_custom_call.1} parent=1 // pred_fallthru
      _
    // Predicated region
    $region46: #{tpu_custom_call.1} parent=1 // pred_check
      _
    $region47: #{tpu_custom_call.1} parent=1 // pred_check_branch
      %285 = sbr.rel (0) target = $region49
    $region48: #{tpu_custom_call.1} parent=1 // pred_region
      %287 = dma.done [#allocation4], 16
    $region49: #{tpu_custom_call.1} parent=1 // pred_fallthru
      _
    %288 = vsyncpa [#allocation3], 1
    %289 = vsyncpa [#allocation6], 1
    %290 = vsyncpa [#allocation9], 1
    %291 = vsyncpa [#allocation4], 1

</llo_original>
